<compile_context>
chip_gen: v5e
topology: v5e:2x2
jax: 0.10.0
libtpu: 0.0.40
codegen_flags: <defaults>
</compile_context>

<pallas_src>
import jax
import jax.numpy as jnp
from jax.experimental import pallas as pl
from jax.experimental.pallas import tpu as pltpu

NEGATIVE_SLOPE = 0.01
IN_FEATURES = 3
OUT_FEATURES = 8


def _linear_leakyrelu_kernel(x_ref, w_ref, b_ref, o_ref):
    # Feature-major tile:
    #   x_ref: (IN, TB)   w_ref: (OUT, IN)   b_ref: (OUT, 1)   o_ref: (OUT, TB)
    in_f = x_ref.shape[0]
    out_f, tb = o_ref.shape

    # Bias lane-broadcast once per grid step.
    acc = jnp.broadcast_to(b_ref[...], (out_f, tb))

    # IN = 3: fully unrolled broadcast-FMA chain on the VPU; no MXU, no MRF/MRB.
    for k in range(in_f):  # static trip count -> unrolled at trace time
        acc = acc + w_ref[:, k:k + 1] * x_ref[k:k + 1, :]

    # LeakyReLU(0.01) == max(a, 0.01 * a) for slope in [0, 1].
    o_ref[...] = jnp.maximum(acc, acc * NEGATIVE_SLOPE).astype(o_ref.dtype)


def linear_leakyrelu(x, w, b, *, tb=32768):
    """x: (B, IN) f32, w: (OUT, IN) f32 (PyTorch layout), b: (OUT,) f32 -> (B, OUT)."""
    B, in_f = x.shape
    out_f = w.shape[0]

    # Feature-major views for the kernel (layout plumbing, done by XLA).
    xt = x.T                      # (IN, B): batch on the lane axis
    b2 = b.reshape(out_f, 1)      # (OUT, 1)

    # Lane tile: multiple of 128, at most round_up(B, 128), at most `tb`.
    tb = max(128, min(int(tb), ((B + 127) // 128) * 128))
    grid = (pl.cdiv(B, tb),)      # ragged last block is masked automatically

    out_t = pl.pallas_call(
        _linear_leakyrelu_kernel,
        out_shape=jax.ShapeDtypeStruct((out_f, B), jnp.float32),
        grid=grid,
        in_specs=[
            pl.BlockSpec((in_f, tb), lambda i: (0, i)),       # batch tile of x^T
            pl.BlockSpec((out_f, in_f), lambda i: (0, 0)),    # grid-invariant weight
            pl.BlockSpec((out_f, 1), lambda i: (0, 0)),       # grid-invariant bias
        ],
        out_specs=pl.BlockSpec((out_f, tb), lambda i: (0, i)),
        compiler_params=pltpu.CompilerParams(
            dimension_semantics=("parallel",)),               # independent batch tiles
    )(xt, w, b2)

    return out_t.T                # (B, OUT), matching the module's output layout


if __name__ == "__main__":
    key = jax.random.PRNGKey(0)
    k_x, k_w, k_b, k_xb = jax.random.split(key, 4)

    # Synthetic parameters matching nn.Linear(3, 8): weight (out, in), bias (out,).
    bound = 1.0 / jnp.sqrt(IN_FEATURES)
    w = jax.random.uniform(k_w, (OUT_FEATURES, IN_FEATURES), jnp.float32, -bound, bound)
    b = jax.random.uniform(k_b, (OUT_FEATURES,), jnp.float32, -bound, bound)

    def ref_fn(xx):
        v1 = xx @ w.T + b
        return jnp.where(v1 > 0, v1, v1 * NEGATIVE_SLOPE)

    # --- spec-sized input: torch.randn(1, 3) ---
    x1 = jax.random.normal(k_x, (1, IN_FEATURES), jnp.float32)
    out = jax.block_until_ready(linear_leakyrelu(x1, w, b))
    assert out.shape == (1, OUT_FEATURES)
    assert jnp.allclose(out, ref_fn(x1), atol=1e-5, rtol=1e-5)

    # --- batched, non-multiple B: exercises multi-step grid + ragged last block ---
    xb = jax.random.normal(k_xb, (1000, IN_FEATURES), jnp.float32)
    outb = jax.block_until_ready(linear_leakyrelu(xb, w, b, tb=512))
    assert outb.shape == (1000, OUT_FEATURES)
    assert jnp.allclose(outb, ref_fn(xb), atol=1e-5, rtol=1e-5)

    print("KERNEL_OK")
</pallas_src>

<mosaic_0001>
module attributes {stable_mosaic.version = 11 : i64} {
  func.func @_linear_leakyrelu_kernel(%arg0: i32, %arg1: memref<3x128xf32, #tpu.memory_space<vmem>>, %arg2: memref<8x3xf32, #tpu.memory_space<vmem>>, %arg3: memref<8x1xf32, #tpu.memory_space<vmem>>, %arg4: memref<8x128xf32, #tpu.memory_space<vmem>>) attributes {dimension_semantics = [#tpu.dimension_semantics<parallel>], iteration_bounds = array<i64: 1>, scalar_prefetch = 0 : i64, scratch_operands = 0 : i64, tpu.core_type = #tpu.core_type<tc>, window_params = [{transform_indices = @transform_0, window_bounds = array<i64: 3, 128>}, {pipeline_mode = #tpu.pipeline_mode<synchronous>, transform_indices = @transform_1, window_bounds = array<i64: 8, 3>}, {pipeline_mode = #tpu.pipeline_mode<synchronous>, transform_indices = @transform_2, window_bounds = array<i64: 8, 1>}, {transform_indices = @transform_3, window_bounds = array<i64: 8, 128>}]} {
    %c0 = arith.constant 0 : index
    %c0_0 = arith.constant 0 : index
    %0 = vector.load %arg3[%c0, %c0_0] : memref<8x1xf32, #tpu.memory_space<vmem>>, vector<8x1xf32>
    %1 = vector.shape_cast %0 : vector<8x1xf32> to vector<8x1xf32>
    %2 = vector.broadcast %1 : vector<8x1xf32> to vector<8x128xf32>
    %c0_1 = arith.constant 0 : index
    %c0_2 = arith.constant 0 : index
    %3 = vector.load %arg2[%c0_1, %c0_2] : memref<8x3xf32, #tpu.memory_space<vmem>>, vector<8x1xf32>
    %c0_3 = arith.constant 0 : index
    %c0_4 = arith.constant 0 : index
    %4 = vector.load %arg1[%c0_3, %c0_4] : memref<3x128xf32, #tpu.memory_space<vmem>>, vector<1x128xf32>
    %5 = vector.broadcast %3 : vector<8x1xf32> to vector<8x128xf32>
    %6 = vector.broadcast %4 : vector<1x128xf32> to vector<8x128xf32>
    %7 = arith.mulf %5, %6 : vector<8x128xf32>
    %8 = arith.addf %2, %7 : vector<8x128xf32>
    %c0_5 = arith.constant 0 : index
    %c1 = arith.constant 1 : index
    %9 = vector.load %arg2[%c0_5, %c1] : memref<8x3xf32, #tpu.memory_space<vmem>>, vector<8x1xf32>
    %c1_6 = arith.constant 1 : index
    %c0_7 = arith.constant 0 : index
    %10 = vector.load %arg1[%c1_6, %c0_7] : memref<3x128xf32, #tpu.memory_space<vmem>>, vector<1x128xf32>
    %11 = vector.broadcast %9 : vector<8x1xf32> to vector<8x128xf32>
    %12 = vector.broadcast %10 : vector<1x128xf32> to vector<8x128xf32>
    %13 = arith.mulf %11, %12 : vector<8x128xf32>
    %14 = arith.addf %8, %13 : vector<8x128xf32>
    %c0_8 = arith.constant 0 : index
    %c2 = arith.constant 2 : index
    %15 = vector.load %arg2[%c0_8, %c2] : memref<8x3xf32, #tpu.memory_space<vmem>>, vector<8x1xf32>
    %c2_9 = arith.constant 2 : index
    %c0_10 = arith.constant 0 : index
    %16 = vector.load %arg1[%c2_9, %c0_10] : memref<3x128xf32, #tpu.memory_space<vmem>>, vector<1x128xf32>
    %17 = vector.broadcast %15 : vector<8x1xf32> to vector<8x128xf32>
    %18 = vector.broadcast %16 : vector<1x128xf32> to vector<8x128xf32>
    %19 = arith.mulf %17, %18 : vector<8x128xf32>
    %20 = arith.addf %14, %19 : vector<8x128xf32>
    %cst = arith.constant 0.00999999977 : f32
    %21 = vector.broadcast %cst : f32 to vector<8x128xf32>
    %22 = arith.mulf %20, %21 : vector<8x128xf32>
    %23 = arith.maximumf %20, %22 : vector<8x128xf32>
    %c0_11 = arith.constant 0 : index
    %c0_12 = arith.constant 0 : index
    %24 = vector.load %arg4[%c0_11, %c0_12] : memref<8x128xf32, #tpu.memory_space<vmem>>, vector<8x128xf32>
    tpu.vector_store %arg4[%c0_11, %c0_12], %23 {strides = array<i32>} : memref<8x128xf32, #tpu.memory_space<vmem>>, vector<8x128xf32>,
    return
  }
  func.func @transform_0(%arg0: i32) -> (i32, i32) {
    %c0_i32 = arith.constant 0 : i32
    %c0_i32_0 = arith.constant 0 : i32
    return %c0_i32, %arg0 : i32, i32
  }
  func.func @transform_1(%arg0: i32) -> (i32, i32) {
    %c0_i32 = arith.constant 0 : i32
    %c0_i32_0 = arith.constant 0 : i32
    %c0_i32_1 = arith.constant 0 : i32
    return %c0_i32, %c0_i32_0 : i32, i32
  }
  func.func @transform_2(%arg0: i32) -> (i32, i32) {
    %c0_i32 = arith.constant 0 : i32
    %c0_i32_0 = arith.constant 0 : i32
    %c0_i32_1 = arith.constant 0 : i32
    return %c0_i32, %c0_i32_0 : i32, i32
  }
  func.func @transform_3(%arg0: i32) -> (i32, i32) {
    %c0_i32 = arith.constant 0 : i32
    %c0_i32_0 = arith.constant 0 : i32
    return %c0_i32, %arg0 : i32, i32
  }
}

</mosaic_0001>

<llo_original>
// kernel: tpu_custom_call.1
$region0: #{tpu_custom_call.1}
  #allocation0 [shape = 'u32[]', space=smem, size = 0x4, offset = 0x4, fixed_abs, tag = 'smem constant byte address 0x4 - core index']
  #allocation1 [shape = 'u32[72,128]{1,0:T(1,128)}', space=vmem, size = 0x9000, scoped, tag = 'internal scratch']
  %s0 = inlined_call_operand.vmem [shape: f32[3,1], index: 0, kind: input, shape index: {}]
  %s1 = inlined_call_operand.vmem [shape: f32[8,3], index: 1, kind: input, shape index: {}]
  %s2 = inlined_call_operand.vmem [shape: f32[8,1], index: 2, kind: input, shape index: {}]
  %s3 = inlined_call_operand.vmem [shape: f32[8,1], index: 3, kind: output, shape index: {}]
  %s4 = sld [smem:[#allocation0]]
  $region22: #{tpu_custom_call.1} parent=0
    _
  %s6 = ssub.s32 1, %s4
  %s7 = scalar_select 0, %s6, %s4
  // Predicated region
  $region2: #{tpu_custom_call.1} parent=0 // pred_check
    _
  $region3: #{tpu_custom_call.1} parent=0 // pred_check_branch
    %9 = sbr.rel (0) target = $region5
  $region4: #{tpu_custom_call.1} parent=0 // pred_region
    _
  $region5: #{tpu_custom_call.1} parent=0 // pred_fallthru
    _
  // Predicated region
  $region6: #{tpu_custom_call.1} parent=0 // pred_check
    _
  $region7: #{tpu_custom_call.1} parent=0 // pred_check_branch
    %11 = sbr.rel (0) target = $region9
  $region8: #{tpu_custom_call.1} parent=0 // pred_region
    _
  $region9: #{tpu_custom_call.1} parent=0 // pred_fallthru
    _
  // Predicated region
  $region10: #{tpu_custom_call.1} parent=0 // pred_check
    _
  $region11: #{tpu_custom_call.1} parent=0 // pred_check_branch
    %13 = sbr.rel (0) target = $region13
  $region12: #{tpu_custom_call.1} parent=0 // pred_region
    _
  $region13: #{tpu_custom_call.1} parent=0 // pred_fallthru
    _
  %v14 = vld [vmem:[%s2] sm:$0xff]
  %16 = vset.pattern.permute.xlu0 0
  %17 = vperm.xlu0 %16, %v14
  %v18 = vpop.permute.xlu0 %17
  %v20 = vld [vmem:[%s1] sm:$0xff]
  %v21 = vld [vmem:[%s0] sm:$0x1]
  %23 = vset.pattern.permute.xlu0 0
  %24 = vperm.xlu0 %23, %v20
  %v25 = vpop.permute.xlu0 %24
  %v27 = vperm.slane %v21, 0
  %v28 = vmul.f32 %v25, %v27
  %v29 = vadd.f32 %v18, %v28
  %v30 = vld [vmem:[%s0 + $0x1] sm:$0x1]
  %31 = vset.pattern.permute.xlu0 1
  %32 = vperm.xlu0 %31, %v20
  %v33 = vpop.permute.xlu0 %32
  %v35 = vperm.slane %v30, 0
  %v36 = vmul.f32 %v33, %v35
  %v37 = vadd.f32 %v29, %v36
  %v38 = vld [vmem:[%s0 + $0x2] sm:$0x1]
  %39 = vset.pattern.permute.xlu0 2
  %40 = vperm.xlu0 %39, %v20
  %v41 = vpop.permute.xlu0 %40
  %v43 = vperm.slane %v38, 0
  %v44 = vmul.f32 %v41, %v43
  %v45 = vadd.f32 %v37, %v44
  %v46 = vmul.f32 %v45, 0.01
  %v47 = vmax.f32 %v45, %v46
  %48 = vst [vmem:[%s3] sm:$0xff] %v47
  // Predicated region
  $region14: #{tpu_custom_call.1} parent=0 // pred_check
    _
  $region15: #{tpu_custom_call.1} parent=0 // pred_check_branch
    %50 = sbr.rel (0) target = $region17
  $region16: #{tpu_custom_call.1} parent=0 // pred_region
    _
  $region17: #{tpu_custom_call.1} parent=0 // pred_fallthru
    _
  // Predicated region
  $region18: #{tpu_custom_call.1} parent=0 // pred_check
    _
  $region19: #{tpu_custom_call.1} parent=0 // pred_check_branch
    %52 = sbr.rel (0) target = $region21
  $region20: #{tpu_custom_call.1} parent=0 // pred_region
    _
  $region21: #{tpu_custom_call.1} parent=0 // pred_fallthru
    _

</llo_original>
